<compile_context>
chip_gen: v5e
topology: v5e:2x2
jax: 0.10.0
libtpu: 0.0.40
codegen_flags: <defaults>
</compile_context>

<pallas_src>
import functools

import jax
import jax.numpy as jnp
from jax import lax
from jax.experimental import pallas as pl
from jax.experimental.pallas import tpu as pltpu

LANE = 128             # vreg lane width
SUBLANE = 8            # vreg sublane count
MAX_BLOCK_ROWS = 2048  # (2048, 128) f32 = 1 MiB per operand per grid step
MAX_GRAM_K = 1024      # K tile for the gram matmul (multiple of 128)
NCORES = 2             # leading "parallel" axis: v7x megacore split; loop elsewhere


# ---------------------------------------------------------------------------
# Reduction kernel: sum(|a-b|) or sum((a-b)^2)
# ---------------------------------------------------------------------------
def _diff_reduce_kernel(a_ref, b_ref, out_ref, *, rows, block_rows, bpc,
                        square, needs_mask):
    """Accumulate per-core partial sums into a resident (8,128) output block."""
    c = pl.program_id(0)
    j = pl.program_id(1)

    @pl.when(j == 0)
    def _init():
        out_ref[...] = jnp.zeros_like(out_ref)

    d = a_ref[...].astype(jnp.float32) - b_ref[...].astype(jnp.float32)
    d = d * d if square else jnp.abs(d)

    if needs_mask:  # static: only emitted when the last/phantom block is ragged
        valid = rows - (c * bpc + j) * block_rows
        row_ids = lax.broadcasted_iota(jnp.int32, (block_rows, LANE), 0)
        d = jnp.where(row_ids < valid, d, 0.0)

    # Fold (block_rows,128) -> (8,128) with pure VPU adds; accumulation stays
    # vreg-shaped, the single cross-lane reduce happens once outside the kernel.
    out_ref[...] += d.reshape(block_rows // SUBLANE, SUBLANE, LANE).sum(axis=0)


def _diff_reduce(a, b, *, square=False):
    """f32 sum over all elements of |a-b| (square=False) or (a-b)^2 (True)."""
    assert a.shape == b.shape, (a.shape, b.shape)
    n = a.size
    flat_a = a.reshape(-1)
    flat_b = b.reshape(-1)

    chunk = SUBLANE * LANE                 # 1024 elements = one (8,128) vreg
    rows = (n // chunk) * SUBLANE          # 8-row-aligned rows handled in-kernel
    n_kernel = rows * LANE

    total = jnp.float32(0.0)
    if n_kernel < n:                       # ragged tail (<1024 elems) in plain JAX
        td = (flat_a[n_kernel:].astype(jnp.float32)
              - flat_b[n_kernel:].astype(jnp.float32))
        total = jnp.sum(td * td) if square else jnp.sum(jnp.abs(td))
    if rows == 0:
        return total

    # Full reshape (no pad, no broadcast) -> lane-dense (rows, 128) view.
    a2 = (flat_a if n_kernel == n else flat_a[:n_kernel]).reshape(rows, LANE)
    b2 = (flat_b if n_kernel == n else flat_b[:n_kernel]).reshape(rows, LANE)

    block_rows = min(MAX_BLOCK_ROWS, rows)          # multiple of 8 by construction
    nblocks = pl.cdiv(rows, block_rows)
    bpc = pl.cdiv(nblocks, NCORES)                  # row-blocks per core
    needs_mask = (rows % block_rows != 0) or (bpc * NCORES != nblocks)

    def in_map(c, j):
        # Clamp so phantom blocks of the second core never index out of bounds
        # (their contribution is masked to zero in-kernel).
        return (jnp.minimum(c * bpc + j, nblocks - 1), 0)

    kernel = functools.partial(
        _diff_reduce_kernel, rows=rows, block_rows=block_rows, bpc=bpc,
        square=square, needs_mask=needs_mask)

    partials = pl.pallas_call(
        kernel,
        out_shape=jax.ShapeDtypeStruct((NCORES * SUBLANE, LANE), jnp.float32),
        grid_spec=pltpu.PrefetchScalarGridSpec(
            num_scalar_prefetch=0,
            grid=(NCORES, bpc),
            in_specs=[pl.BlockSpec((block_rows, LANE), in_map),
                      pl.BlockSpec((block_rows, LANE), in_map)],
            out_specs=pl.BlockSpec((SUBLANE, LANE), lambda c, j: (c, 0)),
        ),
        compiler_params=pltpu.CompilerParams(
            dimension_semantics=("parallel", "arbitrary")),
    )(a2, b2)

    return total + jnp.sum(partials)


# ---------------------------------------------------------------------------
# Gram matrix kernel (style loss): G[n] = F[n] @ F[n]^T / (c*h*w)
# ---------------------------------------------------------------------------
def _gram_kernel(f_ref, out_ref, *, hw, tk, scale):
    k = pl.program_id(1)

    @pl.when(k == 0)
    def _init():
        out_ref[...] = jnp.zeros_like(out_ref)

    f = f_ref[...].astype(jnp.float32)              # (c, tk)
    if hw % tk != 0:                                # static: mask ragged K tail
        valid = hw - k * tk
        col_ids = lax.broadcasted_iota(jnp.int32, f.shape, 1)
        f = jnp.where(col_ids < valid, f, 0.0)

    # MXU "NT" matmul: contract the K axis of f with itself -> (c, c)
    out_ref[...] += lax.dot_general(
        f, f, (((1,), (1,)), ((), ())), preferred_element_type=jnp.float32)

    @pl.when(k == pl.num_programs(1) - 1)
    def _finalize():
        out_ref[...] = out_ref[...] * scale


def _gram_matrix(x):
    """(n, c, h, w) -> (n, c, c) Gram matrices, f32."""
    n, c, h, w = x.shape
    hw = h * w
    feats = x.reshape(n, c, hw)
    tk = hw if hw <= MAX_GRAM_K else MAX_GRAM_K
    nk = pl.cdiv(hw, tk)
    kernel = functools.partial(_gram_kernel, hw=hw, tk=tk,
                               scale=1.0 / float(c * h * w))
    return pl.pallas_call(
        kernel,
        out_shape=jax.ShapeDtypeStruct((n, c, c), jnp.float32),
        grid_spec=pltpu.PrefetchScalarGridSpec(
            num_scalar_prefetch=0,
            grid=(n, nk),
            in_specs=[pl.BlockSpec((None, c, tk), lambda b, k: (b, 0, k))],
            out_specs=pl.BlockSpec((None, c, c), lambda b, k: (b, 0, 0)),
        ),
        compiler_params=pltpu.CompilerParams(
            dimension_semantics=("parallel", "arbitrary")),
    )(feats)


# ---------------------------------------------------------------------------
# PerceptualLoss forward (basicsr semantics) on pre-extracted VGG features
# ---------------------------------------------------------------------------
class PerceptualLoss:
    """Forward-pass equivalent of basicsr PerceptualLoss.

    Operates on dicts of per-layer feature maps (n, c, h, w).
    `vgg_type`, `use_input_norm`, `range_norm` belong to the VGG extractor,
    which is not translated (needs pretrained weights).
    """

    def __init__(self, layer_weights, perceptual_weight=1.0, style_weight=0.0,
                 criterion='l1'):
        if criterion not in ('l1', 'fro'):
            # TODO(synk): original 'l2' branch references nonexistent torch.nn.L2loss.
            raise NotImplementedError(f'{criterion} criterion has not been supported.')
        self.layer_weights = dict(layer_weights)
        self.perceptual_weight = perceptual_weight
        self.style_weight = style_weight
        self.criterion_type = criterion

    def _criterion(self, a, b):
        if self.criterion_type == 'l1':
            return _diff_reduce(a, b, square=False) / float(a.size)   # L1Loss(mean)
        return jnp.sqrt(_diff_reduce(a, b, square=True))              # Frobenius norm

    def __call__(self, x_features, gt_features):
        percep_loss = None
        style_loss = None
        if self.perceptual_weight > 0:
            percep_loss = jnp.float32(0.0)
            for k in x_features:
                percep_loss = percep_loss + self._criterion(
                    x_features[k], gt_features[k]) * self.layer_weights[k]
            percep_loss = percep_loss * self.perceptual_weight
        if self.style_weight > 0:
            style_loss = jnp.float32(0.0)
            for k in x_features:
                gx = _gram_matrix(x_features[k])
                gg = _gram_matrix(gt_features[k])
                style_loss = style_loss + self._criterion(gx, gg) * self.layer_weights[k]
            style_loss = style_loss * self.style_weight
        return percep_loss, style_loss


# ---------------------------------------------------------------------------
if __name__ == "__main__":
    key = jax.random.PRNGKey(0)
    keys = jax.random.split(key, 4)

    # Small pre-extracted "VGG" feature maps for two layers.
    x_features = {
        'relu2_2': jax.random.normal(keys[0], (2, 8, 16, 16), dtype=jnp.float32),
        'relu4_4': jax.random.normal(keys[1], (2, 16, 8, 8), dtype=jnp.float32),
    }
    gt_features = {
        'relu2_2': jax.random.normal(keys[2], (2, 8, 16, 16), dtype=jnp.float32),
        'relu4_4': jax.random.normal(keys[3], (2, 16, 8, 8), dtype=jnp.float32),
    }
    layer_weights = {'relu2_2': 0.5, 'relu4_4': 1.0}

    loss_l1 = PerceptualLoss(layer_weights, perceptual_weight=1.0,
                             style_weight=1.0, criterion='l1')
    percep, style = loss_l1(x_features, gt_features)

    loss_fro = PerceptualLoss(layer_weights, perceptual_weight=1.0,
                              style_weight=1.0, criterion='fro')
    percep_f, style_f = loss_fro(x_features, gt_features)

    jax.block_until_ready((percep, style, percep_f, style_f))

    # plain-JAX reference
    def ref_gram(x):
        n, c, h, w = x.shape
        f = x.reshape(n, c, h * w).astype(jnp.float32)
        return jnp.einsum('nck,ndk->ncd', f, f) / (c * h * w)

    ref_p = 0.0
    ref_s = 0.0
    ref_pf = 0.0
    ref_sf = 0.0
    for k in x_features:
        d = x_features[k].astype(jnp.float32) - gt_features[k].astype(jnp.float32)
        ref_p += jnp.mean(jnp.abs(d)) * layer_weights[k]
        ref_pf += jnp.sqrt(jnp.sum(d * d)) * layer_weights[k]
        dg = ref_gram(x_features[k]) - ref_gram(gt_features[k])
        ref_s += jnp.mean(jnp.abs(dg)) * layer_weights[k]
        ref_sf += jnp.sqrt(jnp.sum(dg * dg)) * layer_weights[k]

    assert jnp.allclose(percep, ref_p, rtol=1e-5, atol=1e-5)
    assert jnp.allclose(style, ref_s, rtol=1e-5, atol=1e-5)
    assert jnp.allclose(percep_f, ref_pf, rtol=2e-5, atol=1e-4)
    assert jnp.allclose(style_f, ref_sf, rtol=2e-5, atol=1e-4)

    print("KERNEL_OK")
</pallas_src>

<mosaic_0001>
module attributes {stable_mosaic.version = 11 : i64} {
  func.func @_diff_reduce_kernel(%arg0: i32, %arg1: i32, %arg2: memref<32x128xf32, #tpu.memory_space<vmem>>, %arg3: memref<32x128xf32, #tpu.memory_space<vmem>>, %arg4: memref<8x128xf32, #tpu.memory_space<vmem>>) attributes {dimension_semantics = [#tpu.dimension_semantics<parallel>, #tpu.dimension_semantics<arbitrary>], iteration_bounds = array<i64: 2, 1>, scalar_prefetch = 0 : i64, scratch_operands = 0 : i64, tpu.core_type = #tpu.core_type<tc>, window_params = [{transform_indices = @transform_0, window_bounds = array<i64: 32, 128>}, {transform_indices = @transform_1, window_bounds = array<i64: 32, 128>}, {transform_indices = @transform_2, window_bounds = array<i64: 8, 128>}]} {
    %c0_i32 = arith.constant 0 : i32
    %0 = arith.cmpi eq, %arg1, %c0_i32 : i32
    %1 = arith.extui %0 : i1 to i32
    %c0_i32_0 = arith.constant 0 : i32
    %2 = arith.cmpi ne, %1, %c0_i32_0 : i32
    scf.if %2 {
      %cst_10 = arith.constant 0.000000e+00 : f32
      %21 = vector.broadcast %cst_10 : f32 to vector<8x128xf32>
      %c0_11 = arith.constant 0 : index
      %c0_12 = arith.constant 0 : index
      %22 = vector.load %arg4[%c0_11, %c0_12] : memref<8x128xf32, #tpu.memory_space<vmem>>, vector<8x128xf32>
      tpu.vector_store %arg4[%c0_11, %c0_12], %21 {strides = array<i32>} : memref<8x128xf32, #tpu.memory_space<vmem>>, vector<8x128xf32>,
    } else {
    }
    %c0 = arith.constant 0 : index
    %c0_1 = arith.constant 0 : index
    %3 = vector.load %arg2[%c0, %c0_1] : memref<32x128xf32, #tpu.memory_space<vmem>>, vector<32x128xf32>
    %c0_2 = arith.constant 0 : index
    %c0_3 = arith.constant 0 : index
    %4 = vector.load %arg3[%c0_2, %c0_3] : memref<32x128xf32, #tpu.memory_space<vmem>>, vector<32x128xf32>
    %5 = arith.subf %3, %4 : vector<32x128xf32>
    %6 = math.absf %5 : vector<32x128xf32>
    %c1_i32 = arith.constant 1 : i32
    %7 = arith.muli %arg0, %c1_i32 : i32
    %8 = arith.addi %7, %arg1 : i32
    %c32_i32 = arith.constant 32 : i32
    %9 = arith.muli %8, %c32_i32 : i32
    %c32_i32_4 = arith.constant 32 : i32
    %10 = arith.subi %c32_i32_4, %9 : i32
    %11 = tpu.iota {dimensions = array<i32: 0>} : vector<32x128xi32>
    %12 = vector.broadcast %10 : i32 to vector<32x128xi32>
    %13 = arith.cmpi slt, %11, %12 : vector<32x128xi32>
    %cst = arith.constant 0.000000e+00 : f32
    %14 = vector.broadcast %cst : f32 to vector<32x128xf32>
    %15 = arith.select %13, %6, %14 : vector<32x128xi1>, vector<32x128xf32>
    %c0_5 = arith.constant 0 : index
    %c0_6 = arith.constant 0 : index
    %16 = vector.load %arg4[%c0_5, %c0_6] : memref<8x128xf32, #tpu.memory_space<vmem>>, vector<8x128xf32>
    %17 = vector.shape_cast %15 : vector<32x128xf32> to vector<4x8x128xf32>
    %cst_7 = arith.constant dense<0.000000e+00> : vector<8x128xf32>
    %18 = vector.multi_reduction <add>, %17, %cst_7 [0] : vector<4x8x128xf32> to vector<8x128xf32>
    %19 = arith.addf %16, %18 : vector<8x128xf32>
    %c0_8 = arith.constant 0 : index
    %c0_9 = arith.constant 0 : index
    %20 = vector.load %arg4[%c0_8, %c0_9] : memref<8x128xf32, #tpu.memory_space<vmem>>, vector<8x128xf32>
    tpu.vector_store %arg4[%c0_8, %c0_9], %19 {strides = array<i32>} : memref<8x128xf32, #tpu.memory_space<vmem>>, vector<8x128xf32>,
    return
  }
  func.func @transform_0(%arg0: i32, %arg1: i32) -> (i32, i32) {
    %c1_i32 = arith.constant 1 : i32
    %0 = arith.muli %arg0, %c1_i32 : i32
    %1 = arith.addi %0, %arg1 : i32
    %c0_i32 = arith.constant 0 : i32
    %2 = arith.minsi %1, %c0_i32 : i32
    %c0_i32_0 = arith.constant 0 : i32
    %c0_i32_1 = arith.constant 0 : i32
    return %2, %c0_i32_0 : i32, i32
  }
  func.func @transform_1(%arg0: i32, %arg1: i32) -> (i32, i32) {
    %c1_i32 = arith.constant 1 : i32
    %0 = arith.muli %arg0, %c1_i32 : i32
    %1 = arith.addi %0, %arg1 : i32
    %c0_i32 = arith.constant 0 : i32
    %2 = arith.minsi %1, %c0_i32 : i32
    %c0_i32_0 = arith.constant 0 : i32
    %c0_i32_1 = arith.constant 0 : i32
    return %2, %c0_i32_0 : i32, i32
  }
  func.func @transform_2(%arg0: i32, %arg1: i32) -> (i32, i32) {
    %c0_i32 = arith.constant 0 : i32
    %c0_i32_0 = arith.constant 0 : i32
    return %arg0, %c0_i32 : i32, i32
  }
}

</mosaic_0001>

<llo_original>
// kernel: tpu_custom_call.1
$region0: #{tpu_custom_call.1}
  #allocation0 [shape = 'u32[]', space=smem, size = 0x4, offset = 0x4, fixed_abs, tag = 'smem constant byte address 0x4 - core index']
  #allocation1 [shape = 'u32[72,128]{1,0:T(1,128)}', space=vmem, size = 0x9000, scoped, tag = 'internal scratch']
  %s0 = inlined_call_operand.hbm [shape: f32[32,128], index: 0, kind: input, shape index: {}]
  %s1 = inlined_call_operand.hbm [shape: f32[32,128], index: 1, kind: input, shape index: {}]
  %s2 = inlined_call_operand.hbm [shape: f32[16,128], index: 2, kind: output, shape index: {}]
  %s3 = sld [smem:[#allocation0]]
  $region53: #{tpu_custom_call.1} parent=0
    _
  %s5 = ssub.s32 1, %s3
  %s6 = scalar_select 0, %s5, %s3
  $region1: #{tpu_custom_call.1} parent=0
    #allocation2 [shape = 'u8[32768]{0}', space=vmem, size = 0x8000, scoped, tag = 'input window, operand 0']
    #allocation3 [shape = 's32[2]{0}', space=sflag, size = 0x8, scoped, tag = 'scoped memory for tpu_custom_call.1']
    #allocation4 [shape = 's32[2]{0}', space=sflag, size = 0x8, scoped, tag = 'scoped memory for tpu_custom_call.1']
    #allocation5 [shape = 'u8[32768]{0}', space=vmem, size = 0x8000, scoped, tag = 'input window, operand 1']
    #allocation6 [shape = 's32[2]{0}', space=sflag, size = 0x8, scoped, tag = 'scoped memory for tpu_custom_call.1']
    #allocation7 [shape = 'u8[8192]{0}', space=vmem, size = 0x2000, scoped, tag = 'output window, operand 0']
    %7 = vsyncpa [#allocation3], 0
    %s8 = scalar_lea.sflag [#allocation3], 1
    %9 = vsyncpa %s8, 0
    %10 = vsyncpa [#allocation6], 0
    %s11 = scalar_lea.sflag [#allocation6], 1
    %12 = vsyncpa %s11, 0
    %13 = vsyncpa [#allocation4], 0
    %s14 = scalar_lea.sflag [#allocation4], 1
    %15 = vsyncpa %s14, 0
    loop: start=0, step=1, limit=4
    $region2: #{tpu_custom_call.1} parent=1 // loop_pre_header
      _
    $region3: #{tpu_custom_call.1} parent=1 // loop_header
      %s17 = sphi 0, %s21
      %p18 = scmp.ge.s32.totalorder %s17, 4
      %s24 = sphi 0, %s36
      %s25 = sphi 0, %s32
      %s26 = sphi 0, %s24
      %s27 = sphi 0, %s25
      %s28 = sphi 0, %s26
      %s29 = sphi 0, %s27
      %s45 = sphi 0, %s47
      %s48 = sphi 0, %s45
      %s49 = sphi 0, %s48
      %s65 = sphi 0, %s49
      %s77 = sphi 0, %s79
      %s80 = sphi 0, %s77
      %s81 = sphi 0, %s80
      %s97 = sphi 0, %s81
      %s103 = sphi 0, %s105
      %s106 = sphi 0, %s103
      %s107 = sphi 0, %s106
      %s123 = sphi 0, %s107
    $region4: #{tpu_custom_call.1} parent=1 // loop_header_branch
      %20 = sbr.rel (%p18) target = $region8
    $region5: #{tpu_custom_call.1} parent=1 // loop_body
      %s22 = ssub.s32 %s17, 1
      %s23 = ssub.s32 %s17, 2
      %s30 = sadd.s32 1, %s25
      %p31 = scmp.ge.s32.totalorder %s30, 1
      %s32 = scalar_select %p31, 0, %s30
      %s33 = sadd.s32 1, %s24
      %s34 = scalar_select %p31, %s33, %s24
      %p35 = scmp.ge.s32.totalorder %s34, 2
      %s36 = scalar_select %p35, 0, %s34
      %s37 = sadd.s32 %s24, %s25
      %p38 = scmp.lt.s32.totalorder %s37, 0
      %s39 = scalar_select %p38, %s37, 0
      %s40 = sadd.s32 %s36, %s32
      %p41 = scmp.lt.s32.totalorder %s40, 0
      %s42 = scalar_select %p41, %s40, 0
      %s43 = ssub.s32 %s39, %s42
      %p44 = scmp.eq.s32.totalorder %s43, 0
      %s46 = sadd.s32 %s45, 1
      %s47 = scalar_select %p44, %s45, %s46
      %p50 = pneg %p44
      %p51 = scmp.eq.s32.totalorder %s17, 1
      %p52 = por %p50, %p51
      %p53 = scmp.ne.s32.totalorder %s45, %s48
      %p54 = scmp.eq.s32.totalorder %s17, 0
      %p55 = por %p53, %p54
      %p56 = scmp.ne.s32.totalorder %s45, %s48
      %p57 = scmp.eq.s32.totalorder %s22, 1
      %p58 = por %p56, %p57
      %p59 = scmp.ne.s32.totalorder %s48, %s49
      %p60 = scmp.eq.s32.totalorder %s22, 0
      %p61 = por %p59, %p60
      %p62 = scmp.ne.s32.totalorder %s48, %s49
      %p63 = scmp.eq.s32.totalorder %s23, 1
      %p64 = por %p62, %p63
      %p66 = scmp.ne.s32.totalorder %s49, %s65
      %p67 = scmp.eq.s32.totalorder %s23, 0
      %p68 = por %p66, %p67
      %s69 = sadd.s32 %s24, %s25
      %p70 = scmp.lt.s32.totalorder %s69, 0
      %s71 = scalar_select %p70, %s69, 0
      %s72 = sadd.s32 %s36, %s32
      %p73 = scmp.lt.s32.totalorder %s72, 0
      %s74 = scalar_select %p73, %s72, 0
      %s75 = ssub.s32 %s71, %s74
      %p76 = scmp.eq.s32.totalorder %s75, 0
      %s78 = sadd.s32 %s77, 1
      %s79 = scalar_select %p76, %s77, %s78
      %p82 = pneg %p76
      %p83 = scmp.eq.s32.totalorder %s17, 1
      %p84 = por %p82, %p83
      %p85 = scmp.ne.s32.totalorder %s77, %s80
      %p86 = scmp.eq.s32.totalorder %s17, 0
      %p87 = por %p85, %p86
      %p88 = scmp.ne.s32.totalorder %s77, %s80
      %p89 = scmp.eq.s32.totalorder %s22, 1
      %p90 = por %p88, %p89
      %p91 = scmp.ne.s32.totalorder %s80, %s81
      %p92 = scmp.eq.s32.totalorder %s22, 0
      %p93 = por %p91, %p92
      %p94 = scmp.ne.s32.totalorder %s80, %s81
      %p95 = scmp.eq.s32.totalorder %s23, 1
      %p96 = por %p94, %p95
      %p98 = scmp.ne.s32.totalorder %s81, %s97
      %p99 = scmp.eq.s32.totalorder %s23, 0
      %p100 = por %p98, %p99
      %s101 = ssub.s32 %s24, %s36
      %p102 = scmp.eq.s32.totalorder %s101, 0
      %s104 = sadd.s32 %s103, 1
      %s105 = scalar_select %p102, %s103, %s104
      %p108 = pneg %p102
      %p109 = scmp.eq.s32.totalorder %s17, 1
      %p110 = por %p108, %p109
      %p111 = scmp.ne.s32.totalorder %s103, %s106
      %p112 = scmp.eq.s32.totalorder %s17, 0
      %p113 = por %p111, %p112
      %p114 = scmp.ne.s32.totalorder %s103, %s106
      %p115 = scmp.eq.s32.totalorder %s22, 1
      %p116 = por %p114, %p115
      %p117 = scmp.ne.s32.totalorder %s106, %s107
      %p118 = scmp.eq.s32.totalorder %s22, 0
      %p119 = por %p117, %p118
      %p120 = scmp.ne.s32.totalorder %s106, %s107
      %p121 = scmp.eq.s32.totalorder %s23, 1
      %p122 = por %p120, %p121
      %p124 = scmp.ne.s32.totalorder %s107, %s123
      %p125 = scmp.eq.s32.totalorder %s23, 0
      %p126 = por %p124, %p125
      %p127 = scmp.le.s32.totalorder 1, %s17
      %p128 = scmp.lt.s32.totalorder %s17, 3
      %p129 = pnand %p127, %p128
      %p130 = pneg %p129
      // Predicated region
      $region9: #{tpu_custom_call.1} parent=5 // pred_check
        _
      $region10: #{tpu_custom_call.1} parent=5 // pred_check_branch
        %132 = sbr.rel (%p129) target = $region12
      $region11: #{tpu_custom_call.1} parent=5 // pred_region
        %s133 = ssub.s32 %s17, 1
      $region12: #{tpu_custom_call.1} parent=5 // pred_fallthru
        _
      %p134 = scmp.lt.s32.totalorder %s17, 2
      // Predicated region
      $region13: #{tpu_custom_call.1} parent=5 // pred_check
        %p135 = pneg %p134
      $region14: #{tpu_custom_call.1} parent=5 // pred_check_branch
        %137 = sbr.rel (%p135) target = $region16
      $region15: #{tpu_custom_call.1} parent=5 // pred_region
        // Predicated region
        $region17: #{tpu_custom_call.1} parent=15 // pred_check
          %p138 = pneg %p55
        $region18: #{tpu_custom_call.1} parent=15 // pred_check_branch
          %140 = sbr.rel (%p138) target = $region20
        $region19: #{tpu_custom_call.1} parent=15 // pred_region
          %s141 = sand.u32 %s45, 1
          %s142 = scalar_lea.sflag [#allocation3], %s141
          %s143 = sand.u32 %s45, 1
          %s144 = smul.addr %s143, 32
          %s145 = scalar_lea.vmem [#allocation2], %s144
          %s146 = sadd.s32 %s24, %s25
          %p147 = scmp.lt.s32.totalorder %s146, 0
          %s148 = scalar_select %p147, %s146, 0
          %s149 = smul.u32 4, %s148
          %151 = vsyncadd %s142, 0
          %s152 = smul.addr %s149, 8
          %s153 = scalar_lea.hbm %s0, %s152
          %s154 = sshll.u32 %s153, 4
          %s155 = int_to_ptr.hbm [resolvable:$true] %s154
          %s156 = sshll.u32 %s145, 4
          %s157 = int_to_ptr.vmem [resolvable:$true] %s156
          %162 = dma.hbm_to_vmem [thread:$0]  %s155, 512, %s157, %s142, 128, 128, 8
        $region20: #{tpu_custom_call.1} parent=15 // pred_fallthru
          _
        // Predicated region
        $region21: #{tpu_custom_call.1} parent=15 // pred_check
          %p163 = pneg %p87
        $region22: #{tpu_custom_call.1} parent=15 // pred_check_branch
          %165 = sbr.rel (%p163) target = $region24
        $region23: #{tpu_custom_call.1} parent=15 // pred_region
          %s166 = sand.u32 %s77, 1
          %s167 = scalar_lea.sflag [#allocation6], %s166
          %s168 = sand.u32 %s77, 1
          %s169 = smul.addr %s168, 32
          %s170 = scalar_lea.vmem [#allocation5], %s169
          %s171 = sadd.s32 %s24, %s25
          %p172 = scmp.lt.s32.totalorder %s171, 0
          %s173 = scalar_select %p172, %s171, 0
          %s174 = smul.u32 4, %s173
          %176 = vsyncadd %s167, 0
          %s177 = smul.addr %s174, 8
          %s178 = scalar_lea.hbm %s1, %s177
          %s179 = sshll.u32 %s178, 4
          %s180 = int_to_ptr.hbm [resolvable:$true] %s179
          %s181 = sshll.u32 %s170, 4
          %s182 = int_to_ptr.vmem [resolvable:$true] %s181
          %187 = dma.hbm_to_vmem [thread:$0]  %s180, 512, %s182, %s167, 128, 128, 8
        $region24: #{tpu_custom_call.1} parent=15 // pred_fallthru
          _
      $region16: #{tpu_custom_call.1} parent=5 // pred_fallthru
        _
      %p188 = scmp.le.s32.totalorder 1, %s17
      %p189 = scmp.lt.s32.totalorder %s17, 3
      %p190 = pnand %p188, %p189
      %p191 = pneg %p190
      // Predicated region
      $region25: #{tpu_custom_call.1} parent=5 // pred_check
        _
      $region26: #{tpu_custom_call.1} parent=5 // pred_check_branch
        %193 = sbr.rel (%p190) target = $region28
      $region27: #{tpu_custom_call.1} parent=5 // pred_region
        %s194 = ssub.s32 %s17, 1
        %s195 = sand.u32 %s48, 1
        %s196 = scalar_lea.sflag [#allocation3], %s195
        %s197 = sand.u32 %s48, 1
        %s198 = smul.addr %s197, 32
        %s199 = scalar_lea.vmem [#allocation2], %s198
        // Predicated region
        $region29: #{tpu_custom_call.1} parent=27 // pred_check
          %p200 = pneg %p61
        $region30: #{tpu_custom_call.1} parent=27 // pred_check_branch
          %202 = sbr.rel (%p200) target = $region32
        $region31: #{tpu_custom_call.1} parent=27 // pred_region
          %204 = dma.done %s196, 512
        $region32: #{tpu_custom_call.1} parent=27 // pred_fallthru
          _
        %s205 = sand.u32 %s80, 1
        %s206 = scalar_lea.sflag [#allocation6], %s205
        %s207 = sand.u32 %s80, 1
        %s208 = smul.addr %s207, 32
        %s209 = scalar_lea.vmem [#allocation5], %s208
        // Predicated region
        $region33: #{tpu_custom_call.1} parent=27 // pred_check
          %p210 = pneg %p93
        $region34: #{tpu_custom_call.1} parent=27 // pred_check_branch
          %212 = sbr.rel (%p210) target = $region36
        $region35: #{tpu_custom_call.1} parent=27 // pred_region
          %214 = dma.done %s206, 512
        $region36: #{tpu_custom_call.1} parent=27 // pred_fallthru
          _
        %s215 = sand.u32 %s48, 1
        %s216 = scalar_lea.sflag [#allocation3], %s215
        %s217 = sand.u32 %s48, 1
        %s218 = smul.addr %s217, 32
        %s219 = scalar_lea.vmem [#allocation2], %s218
        %p220 = pneg %p61
        %p221 = pneg %p58
        %s222 = sand.u32 %s80, 1
        %s223 = scalar_lea.sflag [#allocation6], %s222
        %s224 = sand.u32 %s80, 1
        %s225 = smul.addr %s224, 32
        %s226 = scalar_lea.vmem [#allocation5], %s225
        %p227 = pneg %p93
        %p228 = pneg %p90
        %p229 = pneg %p119
        %p230 = pneg %p116
        %s231 = sand.u32 %s106, 1
        %s232 = scalar_lea.sflag [#allocation4], %s231
        %s233 = sand.u32 %s106, 1
        %s234 = smul.addr %s233, 8
        %s235 = scalar_lea.vmem [#allocation7], %s234
        %s236 = sadd.s32 %s26, %s27
        %p237 = scmp.lt.s32.totalorder %s236, 0
        %s238 = scalar_select %p237, %s236, 0
        %s239 = smul.u32 4, %s238
        %s240 = sadd.s32 %s26, %s27
        %p241 = scmp.lt.s32.totalorder %s240, 0
        %s242 = scalar_select %p241, %s240, 0
        %s243 = smul.u32 4, %s242
        %p244 = scmp.eq.s32.totalorder %s27, 0
        // Predicated region
        $region37: #{tpu_custom_call.1} parent=27 // pred_check
          %p245 = pneg %p244
        $region38: #{tpu_custom_call.1} parent=27 // pred_check_branch
          %247 = sbr.rel (%p245) target = $region40
        $region39: #{tpu_custom_call.1} parent=27 // pred_region
          %248 = vst [vmem:[%s235] sm:$0xff] 0.0
        $region40: #{tpu_custom_call.1} parent=27 // pred_fallthru
          _
        %v249 = vld [vmem:[%s199] sm:$0xff]
        %v250 = vld [vmem:[%s199 + $0x8] sm:$0xff]
        %v251 = vld [vmem:[%s199 + $0x10] sm:$0xff]
        %v252 = vld [vmem:[%s199 + $0x18] sm:$0xff]
        %v253 = vld [vmem:[%s209] sm:$0xff]
        %v254 = vld [vmem:[%s209 + $0x8] sm:$0xff]
        %v255 = vld [vmem:[%s209 + $0x10] sm:$0xff]
        %v256 = vld [vmem:[%s209 + $0x18] sm:$0xff]
        %v257 = vsub.f32 %v249, %v253
        %v258 = vsub.f32 %v250, %v254
        %v259 = vsub.f32 %v251, %v255
        %v260 = vsub.f32 %v252, %v256
        %v261 = vand.u32 2147483647, %v257
        %v262 = vand.u32 2147483647, %v258
        %v263 = vand.u32 2147483647, %v259
        %v264 = vand.u32 2147483647, %v260
        %s265 = sadd.s32 %s26, %s27
        %s266 = smul.u32 %s265, 32
        %s267 = ssub.s32 32, %s266
        %v268 = vlaneseq
        %v269 = vshrl.u32 %v268, 7
        %v270 = vadd.s32 %v269, 8
        %v271 = vadd.s32 %v269, 16
        %v272 = vadd.s32 %v269, 24
        %v273 = vstv %s267
        %vm274 = vcmp.lt.s32.totalorder %v269, %v273
        %vm275 = vcmp.lt.s32.totalorder %v270, %v273
        %vm276 = vcmp.lt.s32.totalorder %v271, %v273
        %vm277 = vcmp.lt.s32.totalorder %v272, %v273
        %v278 = vsel %vm274, %v261, 0.0
        %v279 = vsel %vm275, %v262, 0.0
        %v280 = vsel %vm276, %v263, 0.0
        %v281 = vsel %vm277, %v264, 0.0
        %v282 = vld [vmem:[%s235] sm:$0xff]
        %v283 = vadd.f32 %v278, %v279
        %v284 = vadd.f32 %v283, %v280
        %v285 = vadd.f32 %v284, %v281
        %v286 = vadd.f32 %v282, %v285
        %287 = vst [vmem:[%s235] sm:$0xff] %v286
        %s288 = sand.u32 %s106, 1
        %s289 = scalar_lea.sflag [#allocation4], %s288
        %s290 = sand.u32 %s106, 1
        %s291 = smul.addr %s290, 8
        %s292 = scalar_lea.vmem [#allocation7], %s291
        // Predicated region
        $region41: #{tpu_custom_call.1} parent=27 // pred_check
          %p293 = pneg %p116
        $region42: #{tpu_custom_call.1} parent=27 // pred_check_branch
          %295 = sbr.rel (%p293) target = $region44
        $region43: #{tpu_custom_call.1} parent=27 // pred_region
          %297 = vsyncadd %s289, 0
          %s298 = smul.addr %s26, 8
          %s299 = scalar_lea.hbm %s2, %s298
          %s301 = sshll.u32 %s292, 4
          %s302 = int_to_ptr.vmem [resolvable:$true] %s301
          %s303 = sshll.u32 %s299, 4
          %s304 = int_to_ptr.hbm [resolvable:$true] %s303
          %306 = dma.vmem_to_hbm [thread:$0]  %s302, 128, %s304, %s289
        $region44: #{tpu_custom_call.1} parent=27 // pred_fallthru
          _
      $region28: #{tpu_custom_call.1} parent=5 // pred_fallthru
        _
      %p307 = scmp.le.s32.totalorder 2, %s17
      // Predicated region
      $region45: #{tpu_custom_call.1} parent=5 // pred_check
        %p308 = pneg %p307
      $region46: #{tpu_custom_call.1} parent=5 // pred_check_branch
        %310 = sbr.rel (%p308) target = $region48
      $region47: #{tpu_custom_call.1} parent=5 // pred_region
        %s311 = ssub.s32 %s17, 2
        // Predicated region
        $region49: #{tpu_custom_call.1} parent=47 // pred_check
          %p312 = pneg %p122
        $region50: #{tpu_custom_call.1} parent=47 // pred_check_branch
          %314 = sbr.rel (%p312) target = $region52
        $region51: #{tpu_custom_call.1} parent=47 // pred_region
          %s315 = sand.u32 %s107, 1
          %s316 = scalar_lea.sflag [#allocation4], %s315
          %s317 = sand.u32 %s107, 1
          %s318 = smul.addr %s317, 8
          %s319 = scalar_lea.vmem [#allocation7], %s318
          %321 = dma.done %s316, 128
        $region52: #{tpu_custom_call.1} parent=47 // pred_fallthru
          _
      $region48: #{tpu_custom_call.1} parent=5 // pred_fallthru
        _
    $region6: #{tpu_custom_call.1} parent=1 // loop_footer
      %s21 = sadd.s32 1, %s17
    $region7: #{tpu_custom_call.1} parent=1 // loop_footer_branch
      %16 = sbr.rel target = $region3
    $region8: #{tpu_custom_call.1} parent=1 // loop_exit
      _
    %322 = vsyncpa [#allocation3], 1
    %s323 = scalar_lea.sflag [#allocation3], 1
    %324 = vsyncpa %s323, 1
    %325 = vsyncpa [#allocation6], 1
    %s326 = scalar_lea.sflag [#allocation6], 1
    %327 = vsyncpa %s326, 1
    %328 = vsyncpa [#allocation4], 1
    %s329 = scalar_lea.sflag [#allocation4], 1
    %330 = vsyncpa %s329, 1

</llo_original>
